<compile_context>
chip_gen: v7x
topology: tpu7x:2x2x1
jax: 0.10.0
libtpu: 0.0.40
codegen_flags: <defaults>
</compile_context>

<pallas_src>
import functools

import jax
import jax.numpy as jnp
from jax.experimental import pallas as pl
from jax.experimental.pallas import tpu as pltpu


def _round_up(x, m):
    return ((x + m - 1) // m) * m


def _contrastive_loss_kernel(o1_ref, o2_ref, lbl_ref, out_ref, *,
                             margin, batch, tile_b, needs_mask):
    # diff in the input dtype (bf16-friendly on v6e/v7x); upcast once for the
    # square + lane reduction.  (For bf16 inputs this differs slightly from an
    # all-f32 reference; acceptable for a loss.)
    diff = (o1_ref[...] - o2_ref[...]).astype(jnp.float32)          # (TB, D)
    lbl = lbl_ref[...]                                              # (TB, 1) f32

    # euclidean_distance**2 == sq_dist exactly (includes the +1e-9); only the
    # margin term needs the EUP sqrt.
    sq_dist = jnp.sum(diff * diff, axis=1, keepdims=True) + 1e-9    # (TB, 1)
    dist = jnp.sqrt(sq_dist)                                        # (TB, 1)

    pos = (1.0 - lbl) * sq_dist
    neg = lbl * jnp.square(jnp.maximum(margin - dist, 0.0))
    per_example = pos + neg                                         # (TB, 1)

    def _write(vals):
        # Per-tile partial sum broadcast over the (8, 128) output tile so the
        # store is a full, unmasked, lane-dense vst.  The JAX epilogue reads
        # one element per tile and applies 1/B.
        tile_sum = jnp.sum(vals, keepdims=True)                     # (1, 1)
        out_ref[...] = jnp.broadcast_to(tile_sum, out_ref.shape)

    if needs_mask:
        # Only the last block is ragged; keep the iota/compare/select off the
        # hot path of every other grid step.  Tail rows of the ragged block
        # read undefined VMEM, which the select zeroes (select does not
        # propagate the unselected branch).
        i = pl.program_id(0)
        last = pl.num_programs(0) - 1

        @pl.when(i != last)
        def _full_tile():
            _write(per_example)

        @pl.when(i == last)
        def _ragged_tile():
            row = i * tile_b + jax.lax.broadcasted_iota(
                jnp.int32, (tile_b, 1), 0)
            _write(jnp.where(row < batch, per_example, 0.0))
    else:
        _write(per_example)


def _vmem_budget():
    """(bytes per input block, vmem_limit_bytes), generation-aware.

    Measured streaming kernels reach ~85% of HBM roofline from ~1 MiB blocks
    onward; 4 MiB blocks on 128-MiB-VMEM parts (v5e/v6e) squeeze the last few
    percent, while 2 MiB keeps the double-buffered streams comfortably inside
    v7x's 64 MiB physical VMEM.
    """
    try:
        cap = pltpu.get_tpu_info().vmem_capacity_bytes
    except Exception:  # non-TPU backend / older jax: be conservative.
        cap = 64 * 1024 * 1024
    block = 4 * 1024 * 1024 if cap >= 128 * 1024 * 1024 else 2 * 1024 * 1024
    limit = min(cap // 2, 64 * 1024 * 1024)
    return block, int(limit)


def _choose_tile_b(batch, feat, itemsize, block_bytes):
    """Largest batch tile (multiple of 8) with ~block_bytes per (tb, D) block."""
    tb = block_bytes // max(1, feat * itemsize)
    tb = max(8, (tb // 8) * 8)
    return min(tb, _round_up(batch, 8))


def contrastive_loss(output1, output2, label, margin=1.0):
    """output1, output2: (B, D); label: (B,). Returns scalar f32 loss."""
    B, D = output1.shape
    block_bytes, vmem_limit = _vmem_budget()
    tb = _choose_tile_b(B, D, output1.dtype.itemsize, block_bytes)
    nb = pl.cdiv(B, tb)
    needs_mask = (B % tb) != 0  # ragged last block handled in-kernel (no pad)

    label2d = label.reshape(B, 1).astype(jnp.float32)

    # TODO(synk): if D grows large enough to need its own grid axis, accumulate
    # sq_dist per row across D-tiles and apply +1e-9/sqrt/margin math only on
    # the last D step.
    kernel = functools.partial(
        _contrastive_loss_kernel,
        margin=float(margin), batch=B, tile_b=tb, needs_mask=needs_mask)

    # Default Buffered(2) pipelining; only deepen if a profile still shows
    # exposed DMA at this block size.
    partials = pl.pallas_call(
        kernel,
        out_shape=jax.ShapeDtypeStruct((nb * 8, 128), jnp.float32),
        grid_spec=pltpu.PrefetchScalarGridSpec(
            num_scalar_prefetch=0,
            grid=(nb,),
            in_specs=[
                pl.BlockSpec((tb, D), lambda i: (i, 0)),
                pl.BlockSpec((tb, D), lambda i: (i, 0)),
                pl.BlockSpec((tb, 1), lambda i: (i, 0)),
            ],
            out_specs=pl.BlockSpec((8, 128), lambda i: (i, 0)),
        ),
        compiler_params=pltpu.CompilerParams(
            dimension_semantics=("parallel",),
            vmem_limit_bytes=vmem_limit),
    )(output1, output2, label2d)

    # One partial sum per tile; fold the mean's 1/B here.
    return jnp.sum(partials.reshape(nb, 8, 128)[:, 0, 0]) * (1.0 / B)


def _reference(output1, output2, label, margin=1.0):
    d = jnp.sqrt(jnp.sum((output1 - output2) ** 2, axis=1) + 1e-9)
    return jnp.mean((1.0 - label) * d ** 2
                    + label * jnp.maximum(margin - d, 0.0) ** 2)


if __name__ == "__main__":
    key = jax.random.PRNGKey(0)

    # Case 1: small, tile-aligned batch.
    k1, k2, k3 = jax.random.split(key, 3)
    B, D = 8, 32
    o1 = jax.random.normal(k1, (B, D), dtype=jnp.float32)
    o2 = jax.random.normal(k2, (B, D), dtype=jnp.float32)
    lbl = jax.random.bernoulli(k3, 0.5, (B,)).astype(jnp.float32)
    loss = contrastive_loss(o1, o2, lbl, margin=1.0)
    jax.block_until_ready(loss)
    ref = _reference(o1, o2, lbl, margin=1.0)
    assert jnp.allclose(loss, ref, atol=1e-5, rtol=1e-5), (loss, ref)

    # Case 2: ragged batch (exercises the no-pad masked last block).
    k4, k5, k6 = jax.random.split(jax.random.PRNGKey(1), 3)
    B2, D2 = 10, 32
    p1 = jax.random.normal(k4, (B2, D2), dtype=jnp.float32)
    p2 = jax.random.normal(k5, (B2, D2), dtype=jnp.float32)
    lbl2 = jax.random.bernoulli(k6, 0.5, (B2,)).astype(jnp.float32)
    loss2 = contrastive_loss(p1, p2, lbl2, margin=1.0)
    jax.block_until_ready(loss2)
    ref2 = _reference(p1, p2, lbl2, margin=1.0)
    assert jnp.allclose(loss2, ref2, atol=1e-5, rtol=1e-5), (loss2, ref2)

    print("KERNEL_OK")
</pallas_src>

<mosaic_0001>
module attributes {stable_mosaic.version = 11 : i64} {
  func.func @_contrastive_loss_kernel(%arg0: i32, %arg1: memref<8x32xf32, #tpu.memory_space<vmem>>, %arg2: memref<8x32xf32, #tpu.memory_space<vmem>>, %arg3: memref<8x1xf32, #tpu.memory_space<vmem>>, %arg4: memref<8x128xf32, #tpu.memory_space<vmem>>) attributes {dimension_semantics = [#tpu.dimension_semantics<parallel>], iteration_bounds = array<i64: 1>, scalar_prefetch = 0 : i64, scratch_operands = 0 : i64, tpu.core_type = #tpu.core_type<tc>, window_params = [{transform_indices = @transform_0, window_bounds = array<i64: 8, 32>}, {transform_indices = @transform_1, window_bounds = array<i64: 8, 32>}, {transform_indices = @transform_2, window_bounds = array<i64: 8, 1>}, {transform_indices = @transform_3, window_bounds = array<i64: 8, 128>}]} {
    %c0 = arith.constant 0 : index
    %c0_0 = arith.constant 0 : index
    %0 = vector.load %arg1[%c0, %c0_0] : memref<8x32xf32, #tpu.memory_space<vmem>>, vector<8x32xf32>
    %c0_1 = arith.constant 0 : index
    %c0_2 = arith.constant 0 : index
    %1 = vector.load %arg2[%c0_1, %c0_2] : memref<8x32xf32, #tpu.memory_space<vmem>>, vector<8x32xf32>
    %2 = arith.subf %0, %1 : vector<8x32xf32>
    %c0_3 = arith.constant 0 : index
    %c0_4 = arith.constant 0 : index
    %3 = vector.load %arg3[%c0_3, %c0_4] : memref<8x1xf32, #tpu.memory_space<vmem>>, vector<8x1xf32>
    %4 = arith.mulf %2, %2 : vector<8x32xf32>
    %cst = arith.constant dense<0.000000e+00> : vector<8xf32>
    %5 = vector.multi_reduction <add>, %4, %cst [1] : vector<8x32xf32> to vector<8xf32>
    %6 = vector.shape_cast %5 : vector<8xf32> to vector<8x1xf32>
    %cst_5 = arith.constant 9.99999971E-10 : f32
    %7 = vector.broadcast %cst_5 : f32 to vector<8x1xf32>
    %8 = arith.addf %6, %7 : vector<8x1xf32>
    %9 = math.sqrt %8 : vector<8x1xf32>
    %cst_6 = arith.constant 1.000000e+00 : f32
    %10 = vector.broadcast %cst_6 : f32 to vector<8x1xf32>
    %11 = arith.subf %10, %3 : vector<8x1xf32>
    %12 = arith.mulf %11, %8 : vector<8x1xf32>
    %cst_7 = arith.constant 1.000000e+00 : f32
    %13 = vector.broadcast %cst_7 : f32 to vector<8x1xf32>
    %14 = arith.subf %13, %9 : vector<8x1xf32>
    %cst_8 = arith.constant 0.000000e+00 : f32
    %15 = vector.broadcast %cst_8 : f32 to vector<8x1xf32>
    %16 = arith.maximumf %14, %15 : vector<8x1xf32>
    %17 = arith.mulf %16, %16 : vector<8x1xf32>
    %18 = arith.mulf %3, %17 : vector<8x1xf32>
    %19 = arith.addf %12, %18 : vector<8x1xf32>
    %20 = vector.shape_cast %19 : vector<8x1xf32> to vector<1x8x1xf32>
    %cst_9 = arith.constant dense<0.000000e+00> : vector<1xf32>
    %21 = vector.multi_reduction <add>, %20, %cst_9 [1, 2] : vector<1x8x1xf32> to vector<1xf32>
    %22 = vector.shape_cast %21 : vector<1xf32> to vector<1x1x1xf32>
    %23 = vector.extract %22[0, 0, 0] : f32 from vector<1x1x1xf32>
    %24 = vector.broadcast %23 : f32 to vector<1x1xf32>
    %25 = vector.shape_cast %24 : vector<1x1xf32> to vector<1x1xf32>
    %26 = vector.broadcast %25 : vector<1x1xf32> to vector<8x128xf32>
    %c0_10 = arith.constant 0 : index
    %c0_11 = arith.constant 0 : index
    %27 = vector.load %arg4[%c0_10, %c0_11] : memref<8x128xf32, #tpu.memory_space<vmem>>, vector<8x128xf32>
    tpu.vector_store %arg4[%c0_10, %c0_11], %26 {strides = array<i32>} : memref<8x128xf32, #tpu.memory_space<vmem>>, vector<8x128xf32>,
    return
  }
  func.func @transform_0(%arg0: i32) -> (i32, i32) {
    %c0_i32 = arith.constant 0 : i32
    %c0_i32_0 = arith.constant 0 : i32
    return %arg0, %c0_i32 : i32, i32
  }
  func.func @transform_1(%arg0: i32) -> (i32, i32) {
    %c0_i32 = arith.constant 0 : i32
    %c0_i32_0 = arith.constant 0 : i32
    return %arg0, %c0_i32 : i32, i32
  }
  func.func @transform_2(%arg0: i32) -> (i32, i32) {
    %c0_i32 = arith.constant 0 : i32
    %c0_i32_0 = arith.constant 0 : i32
    return %arg0, %c0_i32 : i32, i32
  }
  func.func @transform_3(%arg0: i32) -> (i32, i32) {
    %c0_i32 = arith.constant 0 : i32
    %c0_i32_0 = arith.constant 0 : i32
    return %arg0, %c0_i32 : i32, i32
  }
}

</mosaic_0001>

<llo_original>
// kernel: tpu_custom_call.1
$region0: #{tpu_custom_call.1}
  #allocation0 [shape = 'u32[]', space=smem, size = 0x4, offset = 0x4, fixed_abs, tag = 'smem constant byte address 0x4 - core index']
  #allocation1 [shape = 'u32[144,128]{1,0:T(1,128)}', space=vmem, size = 0x12000, scoped, tag = 'internal scratch']
  %s0 = inlined_call_operand.vmem [shape: f32[8,32], index: 0, kind: input, shape index: {}]
  %s1 = inlined_call_operand.hbm [shape: f32[8,32], index: 1, kind: input, shape index: {}]
  %s2 = inlined_call_operand.vmem [shape: f32[8,1], index: 2, kind: input, shape index: {}]
  %s3 = inlined_call_operand.hbm [shape: f32[8,128], index: 3, kind: output, shape index: {}]
  %s4 = sld [smem:[#allocation0]]
  $region26: #{tpu_custom_call.1} parent=0
    _
  %s6 = ssub.s32 1, %s4
  %s7 = scalar_select 0, %s6, %s4
  $region1: #{tpu_custom_call.1} parent=0
    #allocation2 [shape = 'u8[4096]{0}', space=vmem, size = 0x1000, scoped, tag = 'input window, operand 1, single buffered']
    #allocation3 [shape = 's32[1]{0}', space=sflag, size = 0x4, scoped, tag = 'scoped memory for tpu_custom_call.1']
    #allocation4 [shape = 's32[1]{0}', space=sflag, size = 0x4, scoped, tag = 'scoped memory for tpu_custom_call.1']
    #allocation5 [shape = 'u8[4096]{0}', space=vmem, size = 0x1000, scoped, tag = 'output window, operand 0, single buffered']
    %8 = vsyncpa [#allocation3], 0
    %9 = vsyncpa [#allocation4], 0
    // Predicated region
    $region2: #{tpu_custom_call.1} parent=1 // pred_check
      _
    $region3: #{tpu_custom_call.1} parent=1 // pred_check_branch
      %11 = sbr.rel (0) target = $region5
    $region4: #{tpu_custom_call.1} parent=1 // pred_region
      _
    $region5: #{tpu_custom_call.1} parent=1 // pred_fallthru
      _
    // Predicated region
    $region6: #{tpu_custom_call.1} parent=1 // pred_check
      _
    $region7: #{tpu_custom_call.1} parent=1 // pred_check_branch
      %13 = sbr.rel (0) target = $region9
    $region8: #{tpu_custom_call.1} parent=1 // pred_region
      %s15 = ssub.s32 128, 128
      %16 = vsyncadd [#allocation3], %s15
      %s18 = sshll.u32 [#allocation2], 4
      %s19 = int_to_ptr.vmem [resolvable:$true] %s18
      %21 = dma.hbm_to_vmem [thread:$0]  %s1, 128, %s19, [#allocation3]
    $region9: #{tpu_custom_call.1} parent=1 // pred_fallthru
      _
    // Predicated region
    $region10: #{tpu_custom_call.1} parent=1 // pred_check
      _
    $region11: #{tpu_custom_call.1} parent=1 // pred_check_branch
      %23 = sbr.rel (0) target = $region13
    $region12: #{tpu_custom_call.1} parent=1 // pred_region
      _
    $region13: #{tpu_custom_call.1} parent=1 // pred_fallthru
      _
    // Predicated region
    $region14: #{tpu_custom_call.1} parent=1 // pred_check
      _
    $region15: #{tpu_custom_call.1} parent=1 // pred_check_branch
      %25 = sbr.rel (0) target = $region17
    $region16: #{tpu_custom_call.1} parent=1 // pred_region
      %26 = dma.done [#allocation3], 128
    $region17: #{tpu_custom_call.1} parent=1 // pred_fallthru
      _
    %v27 = vld [vmem:[%s0] sm:$0xff]
    %v28 = vld [vmem:[#allocation2] sm:$0xff]
    %v29 = vsub.f32 %v27, %v28
    %v30 = vld [vmem:[%s2] sm:$0xff]
    %v31 = vmul.f32 %v29, %v29
    %vm32 = vcmask 261120
    %v33 = vsel %vm32, %v31, 0.0
    %34 = vadd.xlane.f32.xlu0 %v33
    %v35 = vpop.xlane.xlu0 %34
    %v36 = vadd.f32 %v35, 1e-09
    %v37 = vrsqrt.pop %v36
    %v38 = vmul.f32 %v36, %v37
    %vm39 = vcmp.eq.f32.partialorder %v36, inf
    %v40 = vsel %vm39, %v36, %v38
    %vm41 = vcmp.eq.f32.partialorder %v36, 0.0
    %v42 = vand.u32 %v36, 2147483648
    %v43 = vsel %vm41, %v42, %v40
    %v44 = vsub.f32 1.0, %v30
    %v45 = vmul.f32 %v44, %v36
    %v46 = vsub.f32 1.0, %v43
    %v47 = vmax.f32 %v46, 0.0
    %v48 = vmul.f32 %v47, %v47
    %v49 = vmul.f32 %v30, %v48
    %v50 = vadd.f32 %v45, %v49
    %vm51 = vcmask 7168
    %v52 = vsel %vm51, %v50, 0.0
    %53 = vadd.xlane.f32.xlu0 %v52
    %v54 = vpop.xlane.xlu0 %53
    %v55 = vrot.slane %v54, 4
    %v56 = vadd.f32 %v54, %v55
    %v57 = vrot.slane %v56, 2
    %v58 = vadd.f32 %v56, %v57
    %v59 = vrot.slane %v58, 1
    %v60 = vadd.f32 %v58, %v59
    %s61 = vtos %v60
    %v62 = vstv %s61
    %63 = vst [vmem:[#allocation5] sm:$0xff] %v62
    // Predicated region
    $region18: #{tpu_custom_call.1} parent=1 // pred_check
      _
    $region19: #{tpu_custom_call.1} parent=1 // pred_check_branch
      %65 = sbr.rel (0) target = $region21
    $region20: #{tpu_custom_call.1} parent=1 // pred_region
      %s67 = ssub.s32 128, 128
      %68 = vsyncadd [#allocation4], %s67
      %s70 = sshll.u32 [#allocation5], 4
      %s71 = int_to_ptr.vmem [resolvable:$true] %s70
      %73 = dma.vmem_to_hbm [thread:$0]  %s71, 128, %s3, [#allocation4]
    $region21: #{tpu_custom_call.1} parent=1 // pred_fallthru
      _
    // Predicated region
    $region22: #{tpu_custom_call.1} parent=1 // pred_check
      _
    $region23: #{tpu_custom_call.1} parent=1 // pred_check_branch
      %75 = sbr.rel (0) target = $region25
    $region24: #{tpu_custom_call.1} parent=1 // pred_region
      %76 = dma.done [#allocation4], 128
    $region25: #{tpu_custom_call.1} parent=1 // pred_fallthru
      _
    %77 = vsyncpa [#allocation3], 1
    %78 = vsyncpa [#allocation4], 1

</llo_original>
